<compile_context>
chip_gen: v7x
topology: tpu7x:2x2x1
jax: 0.10.0
libtpu: 0.0.40
codegen_flags: <defaults>
</compile_context>

<pallas_src>
import math
import functools
import numpy as np
import jax
import jax.numpy as jnp
from jax import lax
from jax.experimental import pallas as pl
from jax.experimental.pallas import tpu as pltpu


def pos_compat_kernel(pos_ref, wq_ref, wk_ref, out_ref, *, n_heads, key_dim):
    # pos_ref : (1, G, D)    one batch element's node features
    # wq_ref  : (D, H*dk)    fused (head-stacked) query projection weights
    # wk_ref  : (D, H*dk)    fused (head-stacked) key projection weights
    # out_ref : (H, 1, G, G) per-head scaled compatibility for this batch element
    x = pos_ref[0]                                                      # (G, D)

    # Fused, lane-dense projections: one MXU matmul each instead of H tiny ones.
    q = jnp.dot(x, wq_ref[...], preferred_element_type=jnp.float32)     # (G, H*dk)
    k = jnp.dot(x, wk_ref[...], preferred_element_type=jnp.float32)     # (G, H*dk)

    nf = 1.0 / math.sqrt(key_dim)
    for h in range(n_heads):                                            # static unroll (H small)
        qh = q[:, h * key_dim:(h + 1) * key_dim]                        # (G, dk) static slice
        kh = k[:, h * key_dim:(h + 1) * key_dim]                        # (G, dk)
        att = lax.dot_general(qh, kh, (((1,), (1,)), ((), ())),
                              preferred_element_type=jnp.float32)       # (G, G)
        out_ref[h, 0] = (att * nf).astype(out_ref.dtype)


def multi_head_pos_compat(pos, w_query, w_key):
    """pos: (B, G, D);  w_query/w_key: (H, D, dk).  Returns (H, B, G, G)."""
    H, D, dk = w_query.shape
    B, G, Din = pos.shape
    assert Din == D, "input_dim mismatch"

    # Pre-stack per-head weights into a single lane-dense (D, H*dk) slab (done once, outside).
    wq_all = jnp.transpose(w_query, (1, 0, 2)).reshape(D, H * dk)
    wk_all = jnp.transpose(w_key, (1, 0, 2)).reshape(D, H * dk)

    kernel = functools.partial(pos_compat_kernel, n_heads=H, key_dim=dk)

    return pl.pallas_call(
        kernel,
        out_shape=jax.ShapeDtypeStruct((H, B, G, G), jnp.float32),
        grid=(B,),
        in_specs=[
            pl.BlockSpec((1, G, D), lambda b: (b, 0, 0)),       # one batch element per step
            pl.BlockSpec((D, H * dk), lambda b: (0, 0)),        # weights resident in VMEM
            pl.BlockSpec((D, H * dk), lambda b: (0, 0)),
        ],
        out_specs=pl.BlockSpec((H, 1, G, G), lambda b: (0, b, 0, 0)),
        compiler_params=pltpu.CompilerParams(
            dimension_semantics=("parallel",),                  # megacore-shardable on v7x
        ),
    )(pos, wq_all, wk_all)


def ref_forward(pos, w_query, w_key):
    """Plain-JAX mirror of the PyTorch forward (correctness reference)."""
    H, D, dk = w_query.shape
    B, G, _ = pos.shape
    posflat = pos.reshape(-1, D)
    Q = jnp.matmul(posflat, w_query).reshape(H, B, G, dk)   # broadcasts over heads, like torch
    K = jnp.matmul(posflat, w_key).reshape(H, B, G, dk)
    att = jnp.matmul(Q, jnp.swapaxes(K, 2, 3))
    return att / math.sqrt(dk)


if __name__ == "__main__":
    # Small shapes consistent with the module: n_heads=8, embed_dim=32 -> key_dim=4.
    B, G = 2, 8                 # batch, graph size
    D = 32                      # input_dim
    H = 8                       # n_heads
    dk = 32 // H                # key_dim = embed_dim // n_heads

    key = jax.random.PRNGKey(0)
    k0, k1, k2 = jax.random.split(key, 3)

    def u(k, shape, fan):
        s = 1.0 / math.sqrt(fan)
        return jax.random.uniform(k, shape, jnp.float32, -s, s)

    w_query = u(k0, (H, D, dk), dk)     # nn.Parameter(n_heads, input_dim, key_dim)
    w_key = u(k1, (H, D, dk), dk)
    pos = jax.random.normal(k2, (B, G, D), jnp.float32)

    out = multi_head_pos_compat(pos, w_query, w_key)
    jax.block_until_ready(out)

    with jax.default_matmul_precision("highest"):
        ref = ref_forward(pos, w_query, w_key)

    assert out.shape == (H, B, G, G), f"bad output shape {out.shape}"
    assert np.allclose(np.asarray(out), np.asarray(ref), rtol=1e-2, atol=1e-2), \
        "compatibility mismatch vs reference"

    print("KERNEL_OK")
</pallas_src>

<mosaic_0001>
module attributes {stable_mosaic.version = 11 : i64} {
  func.func @pos_compat_kernel(%arg0: i32, %arg1: memref<1x8x32xf32, #tpu.memory_space<vmem>>, %arg2: memref<32x32xf32, #tpu.memory_space<vmem>>, %arg3: memref<32x32xf32, #tpu.memory_space<vmem>>, %arg4: memref<8x1x8x8xf32, #tpu.memory_space<vmem>>) attributes {dimension_semantics = [#tpu.dimension_semantics<parallel>], iteration_bounds = array<i64: 2>, scalar_prefetch = 0 : i64, scratch_operands = 0 : i64, tpu.core_type = #tpu.core_type<tc>, window_params = [{transform_indices = @transform_0, window_bounds = array<i64: 1, 8, 32>}, {pipeline_mode = #tpu.pipeline_mode<synchronous>, transform_indices = @transform_1, window_bounds = array<i64: 32, 32>}, {pipeline_mode = #tpu.pipeline_mode<synchronous>, transform_indices = @transform_2, window_bounds = array<i64: 32, 32>}, {transform_indices = @transform_3, window_bounds = array<i64: 8, 1, 8, 8>}]} {
    %c0 = arith.constant 0 : index
    %c0_0 = arith.constant 0 : index
    %c0_1 = arith.constant 0 : index
    %0 = vector.load %arg1[%c0, %c0_0, %c0_1] : memref<1x8x32xf32, #tpu.memory_space<vmem>>, vector<1x8x32xf32>
    %1 = vector.shape_cast %0 : vector<1x8x32xf32> to vector<8x32xf32>
    %c0_2 = arith.constant 0 : index
    %c0_3 = arith.constant 0 : index
    %2 = vector.load %arg2[%c0_2, %c0_3] : memref<32x32xf32, #tpu.memory_space<vmem>>, vector<32x32xf32>
    %cst = arith.constant dense<0.000000e+00> : vector<8x32xf32>
    %3 = tpu.matmul %1, %2, %cst {dimension_numbers = #tpu.dot_dimension_numbers<[1], [0], [0], [1], [0, 0, 1, 1], [], []>} : vector<8x32xf32>, vector<32x32xf32>, vector<8x32xf32> -> vector<8x32xf32>
    %c0_4 = arith.constant 0 : index
    %c0_5 = arith.constant 0 : index
    %4 = vector.load %arg3[%c0_4, %c0_5] : memref<32x32xf32, #tpu.memory_space<vmem>>, vector<32x32xf32>
    %cst_6 = arith.constant dense<0.000000e+00> : vector<8x32xf32>
    %5 = tpu.matmul %1, %4, %cst_6 {dimension_numbers = #tpu.dot_dimension_numbers<[1], [0], [0], [1], [0, 0, 1, 1], [], []>} : vector<8x32xf32>, vector<32x32xf32>, vector<8x32xf32> -> vector<8x32xf32>
    %6 = vector.extract_strided_slice %3 {offsets = [0, 0], sizes = [8, 4], strides = [1, 1]} : vector<8x32xf32> to vector<8x4xf32>
    %7 = vector.extract_strided_slice %5 {offsets = [0, 0], sizes = [8, 4], strides = [1, 1]} : vector<8x32xf32> to vector<8x4xf32>
    %cst_7 = arith.constant dense<0.000000e+00> : vector<8x8xf32>
    %8 = tpu.matmul %6, %7, %cst_7 {dimension_numbers = #tpu.dot_dimension_numbers<[1], [1], [0], [0], [0, 0, 1, 0], [], []>} : vector<8x4xf32>, vector<8x4xf32>, vector<8x8xf32> -> vector<8x8xf32>
    %cst_8 = arith.constant 5.000000e-01 : f32
    %9 = vector.broadcast %cst_8 : f32 to vector<8x8xf32>
    %10 = arith.mulf %8, %9 : vector<8x8xf32>
    %c0_9 = arith.constant 0 : index
    %c0_10 = arith.constant 0 : index
    %c0_11 = arith.constant 0 : index
    %c0_12 = arith.constant 0 : index
    %11 = vector.load %arg4[%c0_9, %c0_10, %c0_11, %c0_12] : memref<8x1x8x8xf32, #tpu.memory_space<vmem>>, vector<1x1x8x8xf32>
    %12 = vector.shape_cast %11 : vector<1x1x8x8xf32> to vector<8x8xf32>
    %13 = vector.shape_cast %10 : vector<8x8xf32> to vector<1x1x8x8xf32>
    tpu.vector_store %arg4[%c0_9, %c0_10, %c0_11, %c0_12], %13 {strides = array<i32>} : memref<8x1x8x8xf32, #tpu.memory_space<vmem>>, vector<1x1x8x8xf32>,
    %14 = vector.extract_strided_slice %3 {offsets = [0, 4], sizes = [8, 4], strides = [1, 1]} : vector<8x32xf32> to vector<8x4xf32>
    %15 = vector.extract_strided_slice %5 {offsets = [0, 4], sizes = [8, 4], strides = [1, 1]} : vector<8x32xf32> to vector<8x4xf32>
    %cst_13 = arith.constant dense<0.000000e+00> : vector<8x8xf32>
    %16 = tpu.matmul %14, %15, %cst_13 {dimension_numbers = #tpu.dot_dimension_numbers<[1], [1], [0], [0], [0, 0, 1, 0], [], []>} : vector<8x4xf32>, vector<8x4xf32>, vector<8x8xf32> -> vector<8x8xf32>
    %cst_14 = arith.constant 5.000000e-01 : f32
    %17 = vector.broadcast %cst_14 : f32 to vector<8x8xf32>
    %18 = arith.mulf %16, %17 : vector<8x8xf32>
    %c1 = arith.constant 1 : index
    %c0_15 = arith.constant 0 : index
    %c0_16 = arith.constant 0 : index
    %c0_17 = arith.constant 0 : index
    %19 = vector.load %arg4[%c1, %c0_15, %c0_16, %c0_17] : memref<8x1x8x8xf32, #tpu.memory_space<vmem>>, vector<1x1x8x8xf32>
    %20 = vector.shape_cast %19 : vector<1x1x8x8xf32> to vector<8x8xf32>
    %21 = vector.shape_cast %18 : vector<8x8xf32> to vector<1x1x8x8xf32>
    tpu.vector_store %arg4[%c1, %c0_15, %c0_16, %c0_17], %21 {strides = array<i32>} : memref<8x1x8x8xf32, #tpu.memory_space<vmem>>, vector<1x1x8x8xf32>,
    %22 = vector.extract_strided_slice %3 {offsets = [0, 8], sizes = [8, 4], strides = [1, 1]} : vector<8x32xf32> to vector<8x4xf32>
    %23 = vector.extract_strided_slice %5 {offsets = [0, 8], sizes = [8, 4], strides = [1, 1]} : vector<8x32xf32> to vector<8x4xf32>
    %cst_18 = arith.constant dense<0.000000e+00> : vector<8x8xf32>
    %24 = tpu.matmul %22, %23, %cst_18 {dimension_numbers = #tpu.dot_dimension_numbers<[1], [1], [0], [0], [0, 0, 1, 0], [], []>} : vector<8x4xf32>, vector<8x4xf32>, vector<8x8xf32> -> vector<8x8xf32>
    %cst_19 = arith.constant 5.000000e-01 : f32
    %25 = vector.broadcast %cst_19 : f32 to vector<8x8xf32>
    %26 = arith.mulf %24, %25 : vector<8x8xf32>
    %c2 = arith.constant 2 : index
    %c0_20 = arith.constant 0 : index
    %c0_21 = arith.constant 0 : index
    %c0_22 = arith.constant 0 : index
    %27 = vector.load %arg4[%c2, %c0_20, %c0_21, %c0_22] : memref<8x1x8x8xf32, #tpu.memory_space<vmem>>, vector<1x1x8x8xf32>
    %28 = vector.shape_cast %27 : vector<1x1x8x8xf32> to vector<8x8xf32>
    %29 = vector.shape_cast %26 : vector<8x8xf32> to vector<1x1x8x8xf32>
    tpu.vector_store %arg4[%c2, %c0_20, %c0_21, %c0_22], %29 {strides = array<i32>} : memref<8x1x8x8xf32, #tpu.memory_space<vmem>>, vector<1x1x8x8xf32>,
    %30 = vector.extract_strided_slice %3 {offsets = [0, 12], sizes = [8, 4], strides = [1, 1]} : vector<8x32xf32> to vector<8x4xf32>
    %31 = vector.extract_strided_slice %5 {offsets = [0, 12], sizes = [8, 4], strides = [1, 1]} : vector<8x32xf32> to vector<8x4xf32>
    %cst_23 = arith.constant dense<0.000000e+00> : vector<8x8xf32>
    %32 = tpu.matmul %30, %31, %cst_23 {dimension_numbers = #tpu.dot_dimension_numbers<[1], [1], [0], [0], [0, 0, 1, 0], [], []>} : vector<8x4xf32>, vector<8x4xf32>, vector<8x8xf32> -> vector<8x8xf32>
    %cst_24 = arith.constant 5.000000e-01 : f32
    %33 = vector.broadcast %cst_24 : f32 to vector<8x8xf32>
    %34 = arith.mulf %32, %33 : vector<8x8xf32>
    %c3 = arith.constant 3 : index
    %c0_25 = arith.constant 0 : index
    %c0_26 = arith.constant 0 : index
    %c0_27 = arith.constant 0 : index
    %35 = vector.load %arg4[%c3, %c0_25, %c0_26, %c0_27] : memref<8x1x8x8xf32, #tpu.memory_space<vmem>>, vector<1x1x8x8xf32>
    %36 = vector.shape_cast %35 : vector<1x1x8x8xf32> to vector<8x8xf32>
    %37 = vector.shape_cast %34 : vector<8x8xf32> to vector<1x1x8x8xf32>
    tpu.vector_store %arg4[%c3, %c0_25, %c0_26, %c0_27], %37 {strides = array<i32>} : memref<8x1x8x8xf32, #tpu.memory_space<vmem>>, vector<1x1x8x8xf32>,
    %38 = vector.extract_strided_slice %3 {offsets = [0, 16], sizes = [8, 4], strides = [1, 1]} : vector<8x32xf32> to vector<8x4xf32>
    %39 = vector.extract_strided_slice %5 {offsets = [0, 16], sizes = [8, 4], strides = [1, 1]} : vector<8x32xf32> to vector<8x4xf32>
    %cst_28 = arith.constant dense<0.000000e+00> : vector<8x8xf32>
    %40 = tpu.matmul %38, %39, %cst_28 {dimension_numbers = #tpu.dot_dimension_numbers<[1], [1], [0], [0], [0, 0, 1, 0], [], []>} : vector<8x4xf32>, vector<8x4xf32>, vector<8x8xf32> -> vector<8x8xf32>
    %cst_29 = arith.constant 5.000000e-01 : f32
    %41 = vector.broadcast %cst_29 : f32 to vector<8x8xf32>
    %42 = arith.mulf %40, %41 : vector<8x8xf32>
    %c4 = arith.constant 4 : index
    %c0_30 = arith.constant 0 : index
    %c0_31 = arith.constant 0 : index
    %c0_32 = arith.constant 0 : index
    %43 = vector.load %arg4[%c4, %c0_30, %c0_31, %c0_32] : memref<8x1x8x8xf32, #tpu.memory_space<vmem>>, vector<1x1x8x8xf32>
    %44 = vector.shape_cast %43 : vector<1x1x8x8xf32> to vector<8x8xf32>
    %45 = vector.shape_cast %42 : vector<8x8xf32> to vector<1x1x8x8xf32>
    tpu.vector_store %arg4[%c4, %c0_30, %c0_31, %c0_32], %45 {strides = array<i32>} : memref<8x1x8x8xf32, #tpu.memory_space<vmem>>, vector<1x1x8x8xf32>,
    %46 = vector.extract_strided_slice %3 {offsets = [0, 20], sizes = [8, 4], strides = [1, 1]} : vector<8x32xf32> to vector<8x4xf32>
    %47 = vector.extract_strided_slice %5 {offsets = [0, 20], sizes = [8, 4], strides = [1, 1]} : vector<8x32xf32> to vector<8x4xf32>
    %cst_33 = arith.constant dense<0.000000e+00> : vector<8x8xf32>
    %48 = tpu.matmul %46, %47, %cst_33 {dimension_numbers = #tpu.dot_dimension_numbers<[1], [1], [0], [0], [0, 0, 1, 0], [], []>} : vector<8x4xf32>, vector<8x4xf32>, vector<8x8xf32> -> vector<8x8xf32>
    %cst_34 = arith.constant 5.000000e-01 : f32
    %49 = vector.broadcast %cst_34 : f32 to vector<8x8xf32>
    %50 = arith.mulf %48, %49 : vector<8x8xf32>
    %c5 = arith.constant 5 : index
    %c0_35 = arith.constant 0 : index
    %c0_36 = arith.constant 0 : index
    %c0_37 = arith.constant 0 : index
    %51 = vector.load %arg4[%c5, %c0_35, %c0_36, %c0_37] : memref<8x1x8x8xf32, #tpu.memory_space<vmem>>, vector<1x1x8x8xf32>
    %52 = vector.shape_cast %51 : vector<1x1x8x8xf32> to vector<8x8xf32>
    %53 = vector.shape_cast %50 : vector<8x8xf32> to vector<1x1x8x8xf32>
    tpu.vector_store %arg4[%c5, %c0_35, %c0_36, %c0_37], %53 {strides = array<i32>} : memref<8x1x8x8xf32, #tpu.memory_space<vmem>>, vector<1x1x8x8xf32>,
    %54 = vector.extract_strided_slice %3 {offsets = [0, 24], sizes = [8, 4], strides = [1, 1]} : vector<8x32xf32> to vector<8x4xf32>
    %55 = vector.extract_strided_slice %5 {offsets = [0, 24], sizes = [8, 4], strides = [1, 1]} : vector<8x32xf32> to vector<8x4xf32>
    %cst_38 = arith.constant dense<0.000000e+00> : vector<8x8xf32>
    %56 = tpu.matmul %54, %55, %cst_38 {dimension_numbers = #tpu.dot_dimension_numbers<[1], [1], [0], [0], [0, 0, 1, 0], [], []>} : vector<8x4xf32>, vector<8x4xf32>, vector<8x8xf32> -> vector<8x8xf32>
    %cst_39 = arith.constant 5.000000e-01 : f32
    %57 = vector.broadcast %cst_39 : f32 to vector<8x8xf32>
    %58 = arith.mulf %56, %57 : vector<8x8xf32>
    %c6 = arith.constant 6 : index
    %c0_40 = arith.constant 0 : index
    %c0_41 = arith.constant 0 : index
    %c0_42 = arith.constant 0 : index
    %59 = vector.load %arg4[%c6, %c0_40, %c0_41, %c0_42] : memref<8x1x8x8xf32, #tpu.memory_space<vmem>>, vector<1x1x8x8xf32>
    %60 = vector.shape_cast %59 : vector<1x1x8x8xf32> to vector<8x8xf32>
    %61 = vector.shape_cast %58 : vector<8x8xf32> to vector<1x1x8x8xf32>
    tpu.vector_store %arg4[%c6, %c0_40, %c0_41, %c0_42], %61 {strides = array<i32>} : memref<8x1x8x8xf32, #tpu.memory_space<vmem>>, vector<1x1x8x8xf32>,
    %62 = vector.extract_strided_slice %3 {offsets = [0, 28], sizes = [8, 4], strides = [1, 1]} : vector<8x32xf32> to vector<8x4xf32>
    %63 = vector.extract_strided_slice %5 {offsets = [0, 28], sizes = [8, 4], strides = [1, 1]} : vector<8x32xf32> to vector<8x4xf32>
    %cst_43 = arith.constant dense<0.000000e+00> : vector<8x8xf32>
    %64 = tpu.matmul %62, %63, %cst_43 {dimension_numbers = #tpu.dot_dimension_numbers<[1], [1], [0], [0], [0, 0, 1, 0], [], []>} : vector<8x4xf32>, vector<8x4xf32>, vector<8x8xf32> -> vector<8x8xf32>
    %cst_44 = arith.constant 5.000000e-01 : f32
    %65 = vector.broadcast %cst_44 : f32 to vector<8x8xf32>
    %66 = arith.mulf %64, %65 : vector<8x8xf32>
    %c7 = arith.constant 7 : index
    %c0_45 = arith.constant 0 : index
    %c0_46 = arith.constant 0 : index
    %c0_47 = arith.constant 0 : index
    %67 = vector.load %arg4[%c7, %c0_45, %c0_46, %c0_47] : memref<8x1x8x8xf32, #tpu.memory_space<vmem>>, vector<1x1x8x8xf32>
    %68 = vector.shape_cast %67 : vector<1x1x8x8xf32> to vector<8x8xf32>
    %69 = vector.shape_cast %66 : vector<8x8xf32> to vector<1x1x8x8xf32>
    tpu.vector_store %arg4[%c7, %c0_45, %c0_46, %c0_47], %69 {strides = array<i32>} : memref<8x1x8x8xf32, #tpu.memory_space<vmem>>, vector<1x1x8x8xf32>,
    return
  }
  func.func @transform_0(%arg0: i32) -> (i32, i32, i32) {
    %c0_i32 = arith.constant 0 : i32
    %c0_i32_0 = arith.constant 0 : i32
    %c0_i32_1 = arith.constant 0 : i32
    return %arg0, %c0_i32, %c0_i32_0 : i32, i32, i32
  }
  func.func @transform_1(%arg0: i32) -> (i32, i32) {
    %c0_i32 = arith.constant 0 : i32
    %c0_i32_0 = arith.constant 0 : i32
    %c0_i32_1 = arith.constant 0 : i32
    return %c0_i32, %c0_i32_0 : i32, i32
  }
  func.func @transform_2(%arg0: i32) -> (i32, i32) {
    %c0_i32 = arith.constant 0 : i32
    %c0_i32_0 = arith.constant 0 : i32
    %c0_i32_1 = arith.constant 0 : i32
    return %c0_i32, %c0_i32_0 : i32, i32
  }
  func.func @transform_3(%arg0: i32) -> (i32, i32, i32, i32) {
    %c0_i32 = arith.constant 0 : i32
    %c0_i32_0 = arith.constant 0 : i32
    %c0_i32_1 = arith.constant 0 : i32
    %c0_i32_2 = arith.constant 0 : i32
    return %c0_i32, %arg0, %c0_i32_0, %c0_i32_1 : i32, i32, i32, i32
  }
}

</mosaic_0001>

<llo_original>
// kernel: tpu_custom_call.1
$region0: #{tpu_custom_call.1}
  #allocation0 [shape = 'u32[]', space=smem, size = 0x4, offset = 0x4, fixed_abs, tag = 'smem constant byte address 0x4 - core index']
  #allocation1 [shape = 'u32[144,128]{1,0:T(1,128)}', space=vmem, size = 0x12000, scoped, tag = 'internal scratch']
  %s0 = inlined_call_operand.hbm [shape: f32[2,8,32], index: 0, kind: input, shape index: {}]
  %s1 = inlined_call_operand.hbm [shape: f32[32,32], index: 1, kind: input, shape index: {}]
  %s2 = inlined_call_operand.hbm [shape: f32[32,32], index: 2, kind: input, shape index: {}]
  %s3 = inlined_call_operand.hbm [shape: f32[8,2,8,8], index: 3, kind: output, shape index: {}]
  %s4 = sld [smem:[#allocation0]]
  $region57: #{tpu_custom_call.1} parent=0
    _
  %s6 = ssub.s32 1, %s4
  %s7 = scalar_select 0, %s6, %s4
  $region1: #{tpu_custom_call.1} parent=0
    #allocation2 [shape = 'u8[8192]{0}', space=vmem, size = 0x2000, scoped, tag = 'input window, operand 0']
    #allocation3 [shape = 's32[2]{0}', space=sflag, size = 0x8, scoped, tag = 'scoped memory for tpu_custom_call.1']
    #allocation4 [shape = 's32[2]{0}', space=sflag, size = 0x8, scoped, tag = 'scoped memory for tpu_custom_call.1']
    #allocation5 [shape = 'u8[16384]{0}', space=vmem, size = 0x4000, scoped, tag = 'input window, operand 1, single buffered']
    #allocation6 [shape = 's32[1]{0}', space=sflag, size = 0x4, scoped, tag = 'scoped memory for tpu_custom_call.1']
    #allocation7 [shape = 'u8[16384]{0}', space=vmem, size = 0x4000, scoped, tag = 'input window, operand 2, single buffered']
    #allocation8 [shape = 'u8[65536]{0}', space=vmem, size = 0x10000, scoped, tag = 'output window, operand 0']
    %8 = vsyncpa [#allocation3], 0
    %s9 = scalar_lea.sflag [#allocation3], 1
    %10 = vsyncpa %s9, 0
    %11 = vsyncpa [#allocation6], 0
    %12 = vsyncpa [#allocation4], 0
    %s13 = scalar_lea.sflag [#allocation4], 1
    %14 = vsyncpa %s13, 0
    loop: start=0, step=1, limit=4
    $region2: #{tpu_custom_call.1} parent=1 // loop_pre_header
      _
    $region3: #{tpu_custom_call.1} parent=1 // loop_header
      %s16 = sphi 0, %s20
      %p17 = scmp.ge.s32.totalorder %s16, 4
      %s26 = sphi 0, %s28
      %s29 = sphi 0, %s26
      %s30 = sphi 0, %s29
      %s46 = sphi 0, %s30
      %s50 = sphi 0, %s50
      %s52 = sphi 0, %s50
      %s53 = sphi 0, %s52
      %s67 = sphi 0, %s53
      %s71 = sphi 0, %s71
      %s73 = sphi 0, %s71
      %s74 = sphi 0, %s73
      %s88 = sphi 0, %s74
      %s94 = sphi 0, %s96
      %s97 = sphi 0, %s94
      %s98 = sphi 0, %s97
      %s114 = sphi 0, %s98
    $region4: #{tpu_custom_call.1} parent=1 // loop_header_branch
      %19 = sbr.rel (%p17) target = $region8
    $region5: #{tpu_custom_call.1} parent=1 // loop_body
      %s21 = ssub.s32 %s16, 1
      %s22 = ssub.s32 %s16, 2
      %s23 = sadd.s32 %s16, 1
      %s24 = ssub.s32 %s16, %s23
      %p25 = scmp.eq.s32.totalorder %s24, 0
      %s27 = sadd.s32 %s26, 1
      %s28 = scalar_select %p25, %s26, %s27
      %p31 = pneg %p25
      %p32 = scmp.eq.s32.totalorder %s16, 1
      %p33 = por %p31, %p32
      %p34 = scmp.ne.s32.totalorder %s26, %s29
      %p35 = scmp.eq.s32.totalorder %s16, 0
      %p36 = por %p34, %p35
      %p37 = scmp.ne.s32.totalorder %s26, %s29
      %p38 = scmp.eq.s32.totalorder %s21, 1
      %p39 = por %p37, %p38
      %p40 = scmp.ne.s32.totalorder %s29, %s30
      %p41 = scmp.eq.s32.totalorder %s21, 0
      %p42 = por %p40, %p41
      %p43 = scmp.ne.s32.totalorder %s29, %s30
      %p44 = scmp.eq.s32.totalorder %s22, 1
      %p45 = por %p43, %p44
      %p47 = scmp.ne.s32.totalorder %s30, %s46
      %p48 = scmp.eq.s32.totalorder %s22, 0
      %p49 = por %p47, %p48
      %s51 = sadd.s32 %s50, 1
      %p54 = scmp.eq.s32.totalorder %s16, 1
      %p55 = scmp.ne.s32.totalorder %s50, %s52
      %p56 = scmp.eq.s32.totalorder %s16, 0
      %p57 = por %p55, %p56
      %p58 = scmp.ne.s32.totalorder %s50, %s52
      %p59 = scmp.eq.s32.totalorder %s21, 1
      %p60 = por %p58, %p59
      %p61 = scmp.ne.s32.totalorder %s52, %s53
      %p62 = scmp.eq.s32.totalorder %s21, 0
      %p63 = por %p61, %p62
      %p64 = scmp.ne.s32.totalorder %s52, %s53
      %p65 = scmp.eq.s32.totalorder %s22, 1
      %p66 = por %p64, %p65
      %p68 = scmp.ne.s32.totalorder %s53, %s67
      %p69 = scmp.eq.s32.totalorder %s22, 0
      %p70 = por %p68, %p69
      %s72 = sadd.s32 %s71, 1
      %p75 = scmp.eq.s32.totalorder %s16, 1
      %p76 = scmp.ne.s32.totalorder %s71, %s73
      %p77 = scmp.eq.s32.totalorder %s16, 0
      %p78 = por %p76, %p77
      %p79 = scmp.ne.s32.totalorder %s71, %s73
      %p80 = scmp.eq.s32.totalorder %s21, 1
      %p81 = por %p79, %p80
      %p82 = scmp.ne.s32.totalorder %s73, %s74
      %p83 = scmp.eq.s32.totalorder %s21, 0
      %p84 = por %p82, %p83
      %p85 = scmp.ne.s32.totalorder %s73, %s74
      %p86 = scmp.eq.s32.totalorder %s22, 1
      %p87 = por %p85, %p86
      %p89 = scmp.ne.s32.totalorder %s74, %s88
      %p90 = scmp.eq.s32.totalorder %s22, 0
      %p91 = por %p89, %p90
      %s92 = ssub.s32 %s16, %s23
      %p93 = scmp.eq.s32.totalorder %s92, 0
      %s95 = sadd.s32 %s94, 1
      %s96 = scalar_select %p93, %s94, %s95
      %p99 = pneg %p93
      %p100 = scmp.eq.s32.totalorder %s16, 1
      %p101 = por %p99, %p100
      %p102 = scmp.ne.s32.totalorder %s94, %s97
      %p103 = scmp.eq.s32.totalorder %s16, 0
      %p104 = por %p102, %p103
      %p105 = scmp.ne.s32.totalorder %s94, %s97
      %p106 = scmp.eq.s32.totalorder %s21, 1
      %p107 = por %p105, %p106
      %p108 = scmp.ne.s32.totalorder %s97, %s98
      %p109 = scmp.eq.s32.totalorder %s21, 0
      %p110 = por %p108, %p109
      %p111 = scmp.ne.s32.totalorder %s97, %s98
      %p112 = scmp.eq.s32.totalorder %s22, 1
      %p113 = por %p111, %p112
      %p115 = scmp.ne.s32.totalorder %s98, %s114
      %p116 = scmp.eq.s32.totalorder %s22, 0
      %p117 = por %p115, %p116
      %p118 = scmp.le.s32.totalorder 1, %s16
      %p119 = scmp.lt.s32.totalorder %s16, 3
      %p120 = pnand %p118, %p119
      %p121 = pneg %p120
      // Predicated region
      $region9: #{tpu_custom_call.1} parent=5 // pred_check
        _
      $region10: #{tpu_custom_call.1} parent=5 // pred_check_branch
        %123 = sbr.rel (%p120) target = $region12
      $region11: #{tpu_custom_call.1} parent=5 // pred_region
        %s124 = ssub.s32 %s16, 1
        // Predicated region
        $region13: #{tpu_custom_call.1} parent=11 // pred_check
          %p125 = pneg %p63
        $region14: #{tpu_custom_call.1} parent=11 // pred_check_branch
          %127 = sbr.rel (%p125) target = $region16
        $region15: #{tpu_custom_call.1} parent=11 // pred_region
          %s129 = ssub.s32 512, 512
          %130 = vsyncadd [#allocation6], %s129
          %s131 = sshll.u32 [#allocation5], 4
          %s132 = int_to_ptr.vmem [resolvable:$true] %s131
          %137 = dma.hbm_to_vmem [thread:$0]  %s1, 512, %s132, [#allocation6], 128, 128, 8
        $region16: #{tpu_custom_call.1} parent=11 // pred_fallthru
          _
        // Predicated region
        $region17: #{tpu_custom_call.1} parent=11 // pred_check
          %p138 = pneg %p84
        $region18: #{tpu_custom_call.1} parent=11 // pred_check_branch
          %140 = sbr.rel (%p138) target = $region20
        $region19: #{tpu_custom_call.1} parent=11 // pred_region
          %s142 = ssub.s32 512, 512
          %143 = vsyncadd [#allocation6], %s142
          %s144 = sshll.u32 [#allocation7], 4
          %s145 = int_to_ptr.vmem [resolvable:$true] %s144
          %150 = dma.hbm_to_vmem [thread:$0]  %s2, 512, %s145, [#allocation6], 128, 128, 8
        $region20: #{tpu_custom_call.1} parent=11 // pred_fallthru
          _
      $region12: #{tpu_custom_call.1} parent=5 // pred_fallthru
        _
      %p151 = scmp.lt.s32.totalorder %s16, 2
      // Predicated region
      $region21: #{tpu_custom_call.1} parent=5 // pred_check
        %p152 = pneg %p151
      $region22: #{tpu_custom_call.1} parent=5 // pred_check_branch
        %154 = sbr.rel (%p152) target = $region24
      $region23: #{tpu_custom_call.1} parent=5 // pred_region
        // Predicated region
        $region25: #{tpu_custom_call.1} parent=23 // pred_check
          %p155 = pneg %p36
        $region26: #{tpu_custom_call.1} parent=23 // pred_check_branch
          %157 = sbr.rel (%p155) target = $region28
        $region27: #{tpu_custom_call.1} parent=23 // pred_region
          %s158 = sand.u32 %s26, 1
          %s159 = scalar_lea.sflag [#allocation3], %s158
          %s160 = sand.u32 %s26, 1
          %s161 = smul.addr %s160, 8
          %s162 = scalar_lea.vmem [#allocation2], %s161
          %s164 = ssub.s32 128, 128
          %165 = vsyncadd %s159, %s164
          %s166 = smul.addr %s16, 128
          %s167 = scalar_lea.hbm %s0, %s166
          %s169 = sshll.u32 %s162, 4
          %s170 = int_to_ptr.vmem [resolvable:$true] %s169
          %172 = dma.hbm_to_vmem [thread:$0]  %s167, 128, %s170, %s159
        $region28: #{tpu_custom_call.1} parent=23 // pred_fallthru
          _
      $region24: #{tpu_custom_call.1} parent=5 // pred_fallthru
        _
      %p173 = scmp.le.s32.totalorder 1, %s16
      %p174 = scmp.lt.s32.totalorder %s16, 3
      %p175 = pnand %p173, %p174
      %p176 = pneg %p175
      // Predicated region
      $region29: #{tpu_custom_call.1} parent=5 // pred_check
        _
      $region30: #{tpu_custom_call.1} parent=5 // pred_check_branch
        %178 = sbr.rel (%p175) target = $region32
      $region31: #{tpu_custom_call.1} parent=5 // pred_region
        %s179 = ssub.s32 %s16, 1
        %s180 = sand.u32 %s29, 1
        %s181 = scalar_lea.sflag [#allocation3], %s180
        %s182 = sand.u32 %s29, 1
        %s183 = smul.addr %s182, 8
        %s184 = scalar_lea.vmem [#allocation2], %s183
        // Predicated region
        $region33: #{tpu_custom_call.1} parent=31 // pred_check
          %p185 = pneg %p42
        $region34: #{tpu_custom_call.1} parent=31 // pred_check_branch
          %187 = sbr.rel (%p185) target = $region36
        $region35: #{tpu_custom_call.1} parent=31 // pred_region
          %188 = dma.done %s181, 128
        $region36: #{tpu_custom_call.1} parent=31 // pred_fallthru
          _
        // Predicated region
        $region37: #{tpu_custom_call.1} parent=31 // pred_check
          %p189 = pneg %p63
        $region38: #{tpu_custom_call.1} parent=31 // pred_check_branch
          %191 = sbr.rel (%p189) target = $region40
        $region39: #{tpu_custom_call.1} parent=31 // pred_region
          %192 = dma.done [#allocation6], 512
        $region40: #{tpu_custom_call.1} parent=31 // pred_fallthru
          _
        // Predicated region
        $region41: #{tpu_custom_call.1} parent=31 // pred_check
          %p193 = pneg %p84
        $region42: #{tpu_custom_call.1} parent=31 // pred_check_branch
          %195 = sbr.rel (%p193) target = $region44
        $region43: #{tpu_custom_call.1} parent=31 // pred_region
          %196 = dma.done [#allocation6], 512
        $region44: #{tpu_custom_call.1} parent=31 // pred_fallthru
          _
        %s197 = sand.u32 %s29, 1
        %s198 = scalar_lea.sflag [#allocation3], %s197
        %s199 = sand.u32 %s29, 1
        %s200 = smul.addr %s199, 8
        %s201 = scalar_lea.vmem [#allocation2], %s200
        %p202 = pneg %p42
        %p203 = pneg %p39
        %p204 = pneg %p63
        %p205 = pneg %p60
        %p206 = pneg %p84
        %p207 = pneg %p81
        %p208 = pneg %p110
        %p209 = pneg %p107
        %s210 = sand.u32 %s97, 1
        %s211 = scalar_lea.sflag [#allocation4], %s210
        %s212 = sand.u32 %s97, 1
        %s213 = smul.addr %s212, 64
        %s214 = scalar_lea.vmem [#allocation8], %s213
        %v215 = vld [vmem:[%s184] sm:$0xff]
        %v216 = vld [vmem:[#allocation5] sm:$0xff]
        %v217 = vld [vmem:[#allocation5 + $0x8] sm:$0xff]
        %v218 = vld [vmem:[#allocation5 + $0x10] sm:$0xff]
        %v219 = vld [vmem:[#allocation5 + $0x18] sm:$0xff]
        %vm220 = vcmask 261120
        %v222 = vsel %vm220, %v215, 0
        %224 = vmatprep.subr.mxu0 0.0
        %225 = vmatpush1.msra.mxu0 %v216
        %226 = vmatprep.subr.mxu0 0.0
        %227 = vmatpush1.msra.mxu0 %v217
        %228 = vmatprep.subr.mxu0 0.0
        %229 = vmatpush1.msra.mxu0 %v218
        %230 = vmatprep.subr.mxu0 0.0
        %231 = vmatpush1.msra.mxu0 %v219
        %232 = vmatprep.subr.mxu0 0.0
        %233 = vmatpush1.msra.mxu0 0.0
        %234 = vmatprep.subr.mxu0 0.0
        %235 = vmatpush1.msra.mxu0 0.0
        %236 = vmatprep.subr.mxu0 0.0
        %237 = vmatpush1.msra.mxu0 0.0
        %238 = vmatprep.subr.mxu0 0.0
        %239 = vmatpush1.msra.mxu0 0.0
        %240 = vmatprep.subr.mxu0 0.0
        %241 = vmatpush1.msra.mxu0 0.0
        %242 = vmatprep.subr.mxu0 0.0
        %243 = vmatpush1.msra.mxu0 0.0
        %244 = vmatprep.subr.mxu0 0.0
        %245 = vmatpush1.msra.mxu0 0.0
        %246 = vmatprep.subr.mxu0 0.0
        %247 = vmatpush1.msra.mxu0 0.0
        %248 = vmatprep.subr.mxu0 0.0
        %249 = vmatpush1.msra.mxu0 0.0
        %250 = vmatprep.subr.mxu0 0.0
        %251 = vmatpush1.msra.mxu0 0.0
        %252 = vmatprep.subr.mxu0 0.0
        %253 = vmatpush1.msra.mxu0 0.0
        %254 = vmatprep.subr.mxu0 0.0
        %255 = vmatpush1.msra.mxu0 0.0
        %256 = vmatprep.subr.mxu0 0.0
        %257 = vmatpush1.msra.mxu0 0.0
        %258 = vmatprep.subr.mxu0 0.0
        %259 = vmatpush1.msra.mxu0 0.0
        %260 = vmatprep.subr.mxu0 0.0
        %261 = vmatpush1.msra.mxu0 0.0
        %262 = vmatprep.subr.mxu0 0.0
        %263 = vmatpush1.msra.mxu0 0.0
        %264 = vmatprep.subr.mxu0 0.0
        %265 = vmatpush1.msra.mxu0 0.0
        %266 = vmatprep.subr.mxu0 0.0
        %267 = vmatpush1.msra.mxu0 0.0
        %268 = vmatprep.subr.mxu0 0.0
        %269 = vmatpush1.msra.mxu0 0.0
        %270 = vmatprep.subr.mxu0 0.0
        %271 = vmatpush1.msra.mxu0 0.0
        %272 = vmatprep.subr.mxu0 0.0
        %273 = vmatpush1.msra.mxu0 0.0
        %274 = vmatprep.subr.mxu0 0.0
        %275 = vmatpush1.msra.mxu0 0.0
        %276 = vmatprep.subr.mxu0 0.0
        %277 = vmatpush1.msra.mxu0 0.0
        %278 = vmatprep.subr.mxu0 0.0
        %279 = vmatpush1.msra.mxu0 0.0
        %280 = vmatprep.subr.mxu0 0.0
        %281 = vmatpush1.msra.mxu0 0.0
        %282 = vmatprep.subr.mxu0 0.0
        %283 = vmatpush1.msra.mxu0 0.0
        %284 = vmatprep.subr.mxu0 0.0
        %285 = vmatpush1.msra.mxu0 0.0
        %286 = vmatprep.subr.mxu0 0.0
        %287 = vmatpush1.msra.mxu0 0.0
        %288 = vmatprep.mubr.f32.mxu0 0.0
        %289 = vmatmul.mubr.f32.gmra.mrb[0].mxu0 %v222
        %v290 = vpop.f32.mrb[0].mxu0
        %v291 = vadd.f32 0.0, %v290
        %v292 = vpop.f32.mrb[0].mxu0
        %293 = vdwg.mxu0
        %v294 = vld [vmem:[#allocation7] sm:$0xff]
        %v295 = vld [vmem:[#allocation7 + $0x8] sm:$0xff]
        %v296 = vld [vmem:[#allocation7 + $0x10] sm:$0xff]
        %v297 = vld [vmem:[#allocation7 + $0x18] sm:$0xff]
        %298 = vmatprep.subr.mxu0 0.0
        %299 = vmatpush1.msra.mxu0 %v294
        %300 = vmatprep.subr.mxu0 0.0
        %301 = vmatpush1.msra.mxu0 %v295
        %302 = vmatprep.subr.mxu0 0.0
        %303 = vmatpush1.msra.mxu0 %v296
        %304 = vmatprep.subr.mxu0 0.0
        %305 = vmatpush1.msra.mxu0 %v297
        %306 = vmatprep.subr.mxu0 0.0
        %307 = vmatpush1.msra.mxu0 0.0
        %308 = vmatprep.subr.mxu0 0.0
        %309 = vmatpush1.msra.mxu0 0.0
        %310 = vmatprep.subr.mxu0 0.0
        %311 = vmatpush1.msra.mxu0 0.0
        %312 = vmatprep.subr.mxu0 0.0
        %313 = vmatpush1.msra.mxu0 0.0
        %314 = vmatprep.subr.mxu0 0.0
        %315 = vmatpush1.msra.mxu0 0.0
        %316 = vmatprep.subr.mxu0 0.0
        %317 = vmatpush1.msra.mxu0 0.0
        %318 = vmatprep.subr.mxu0 0.0
        %319 = vmatpush1.msra.mxu0 0.0
        %320 = vmatprep.subr.mxu0 0.0
        %321 = vmatpush1.msra.mxu0 0.0
        %322 = vmatprep.subr.mxu0 0.0
        %323 = vmatpush1.msra.mxu0 0.0
        %324 = vmatprep.subr.mxu0 0.0
        %325 = vmatpush1.msra.mxu0 0.0
        %326 = vmatprep.subr.mxu0 0.0
        %327 = vmatpush1.msra.mxu0 0.0
        %328 = vmatprep.subr.mxu0 0.0
        %329 = vmatpush1.msra.mxu0 0.0
        %330 = vmatprep.subr.mxu0 0.0
        %331 = vmatpush1.msra.mxu0 0.0
        %332 = vmatprep.subr.mxu0 0.0
        %333 = vmatpush1.msra.mxu0 0.0
        %334 = vmatprep.subr.mxu0 0.0
        %335 = vmatpush1.msra.mxu0 0.0
        %336 = vmatprep.subr.mxu0 0.0
        %337 = vmatpush1.msra.mxu0 0.0
        %338 = vmatprep.subr.mxu0 0.0
        %339 = vmatpush1.msra.mxu0 0.0
        %340 = vmatprep.subr.mxu0 0.0
        %341 = vmatpush1.msra.mxu0 0.0
        %342 = vmatprep.subr.mxu0 0.0
        %343 = vmatpush1.msra.mxu0 0.0
        %344 = vmatprep.subr.mxu0 0.0
        %345 = vmatpush1.msra.mxu0 0.0
        %346 = vmatprep.subr.mxu0 0.0
        %347 = vmatpush1.msra.mxu0 0.0
        %348 = vmatprep.subr.mxu0 0.0
        %349 = vmatpush1.msra.mxu0 0.0
        %350 = vmatprep.subr.mxu0 0.0
        %351 = vmatpush1.msra.mxu0 0.0
        %352 = vmatprep.subr.mxu0 0.0
        %353 = vmatpush1.msra.mxu0 0.0
        %354 = vmatprep.subr.mxu0 0.0
        %355 = vmatpush1.msra.mxu0 0.0
        %356 = vmatprep.subr.mxu0 0.0
        %357 = vmatpush1.msra.mxu0 0.0
        %358 = vmatprep.subr.mxu0 0.0
        %359 = vmatpush1.msra.mxu0 0.0
        %360 = vmatprep.subr.mxu0 0.0
        %361 = vmatpush1.msra.mxu0 0.0
        %362 = vmatprep.mubr.f32.mxu0 0.0
        %363 = vmatmul.mubr.f32.gmra.mrb[0].mxu0 %v222
        %v364 = vpop.f32.mrb[0].mxu0
        %v365 = vadd.f32 0.0, %v364
        %v366 = vpop.f32.mrb[0].mxu0
        %367 = vdwg.mxu0
        %vm368 = vcmask 31744
        %v370 = vsel %vm368, %v291, 0
        %v373 = vsel %vm368, %v365, 0
        %375 = vmatprep.subr.mxu0 0.0
        %376 = vmatpush1.xpose.msra.mxu0 %v373
        %377 = vmatprep.subr.mxu0 0.0
        %378 = vmatpush1.xpose.msra.mxu0 0.0
        %379 = vmatprep.subr.mxu0 0.0
        %380 = vmatpush1.xpose.msra.mxu0 0.0
        %381 = vmatprep.subr.mxu0 0.0
        %382 = vmatpush1.xpose.msra.mxu0 0.0
        %383 = vmatprep.subr.mxu0 0.0
        %384 = vmatpush1.xpose.msra.mxu0 0.0
        %385 = vmatprep.subr.mxu0 0.0
        %386 = vmatpush1.xpose.msra.mxu0 0.0
        %387 = vmatprep.subr.mxu0 0.0
        %388 = vmatpush1.xpose.msra.mxu0 0.0
        %389 = vmatprep.subr.mxu0 0.0
        %390 = vmatpush1.xpose.msra.mxu0 0.0
        %391 = vmatprep.subr.mxu0 0.0
        %392 = vmatpush1.xpose.msra.mxu0 0.0
        %393 = vmatprep.subr.mxu0 0.0
        %394 = vmatpush1.xpose.msra.mxu0 0.0
        %395 = vmatprep.subr.mxu0 0.0
        %396 = vmatpush1.xpose.msra.mxu0 0.0
        %397 = vmatprep.subr.mxu0 0.0
        %398 = vmatpush1.xpose.msra.mxu0 0.0
        %399 = vmatprep.subr.mxu0 0.0
        %400 = vmatpush1.xpose.msra.mxu0 0.0
        %401 = vmatprep.subr.mxu0 0.0
        %402 = vmatpush1.xpose.msra.mxu0 0.0
        %403 = vmatprep.subr.mxu0 0.0
        %404 = vmatpush1.xpose.msra.mxu0 0.0
        %405 = vmatprep.subr.mxu0 0.0
        %406 = vmatpush1.xpose.msra.mxu0 0.0
        %407 = vmatprep.subr.mxu0 0.0
        %408 = vmatpush1.xpose.msra.mxu0 0.0
        %409 = vmatprep.subr.mxu0 0.0
        %410 = vmatpush1.xpose.msra.mxu0 0.0
        %411 = vmatprep.subr.mxu0 0.0
        %412 = vmatpush1.xpose.msra.mxu0 0.0
        %413 = vmatprep.subr.mxu0 0.0
        %414 = vmatpush1.xpose.msra.mxu0 0.0
        %415 = vmatprep.subr.mxu0 0.0
        %416 = vmatpush1.xpose.msra.mxu0 0.0
        %417 = vmatprep.subr.mxu0 0.0
        %418 = vmatpush1.xpose.msra.mxu0 0.0
        %419 = vmatprep.subr.mxu0 0.0
        %420 = vmatpush1.xpose.msra.mxu0 0.0
        %421 = vmatprep.subr.mxu0 0.0
        %422 = vmatpush1.xpose.msra.mxu0 0.0
        %423 = vmatprep.subr.mxu0 0.0
        %424 = vmatpush1.xpose.msra.mxu0 0.0
        %425 = vmatprep.subr.mxu0 0.0
        %426 = vmatpush1.xpose.msra.mxu0 0.0
        %427 = vmatprep.subr.mxu0 0.0
        %428 = vmatpush1.xpose.msra.mxu0 0.0
        %429 = vmatprep.subr.mxu0 0.0
        %430 = vmatpush1.xpose.msra.mxu0 0.0
        %431 = vmatprep.subr.mxu0 0.0
        %432 = vmatpush1.xpose.msra.mxu0 0.0
        %433 = vmatprep.subr.mxu0 0.0
        %434 = vmatpush1.xpose.msra.mxu0 0.0
        %435 = vmatprep.subr.mxu0 0.0
        %436 = vmatpush1.xpose.msra.mxu0 0.0
        %437 = vmatprep.subr.mxu0 0.0
        %438 = vmatpush1.xpose.msra.mxu0 0.0
        %439 = vmatprep.mubr.f32.mxu0 0.0
        %440 = vmatmul.mubr.f32.gmra.mrb[0].mxu0 %v370
        %v441 = vpop.f32.mrb[0].mxu0
        %v442 = vadd.f32 0.0, %v441
        %v443 = vpop.f32.mrb[0].mxu0
        %444 = vdwg.mxu0
        %v445 = vmul.f32 %v442, 0.5
        %vm446 = vcmask 64512
        %447 = vst.msk [vmem:[%s214] sm:$0xff] %vm446, %v445
        %448 = vrot.lane.b32.xlu0 %v291, 124
        %v449 = vpop.permute.xlu0 %448
        %450 = vrot.lane.b32.xlu0 %v365, 124
        %v451 = vpop.permute.xlu0 %450
        %v452 = vsel %vm368, %v449, 0
        %v454 = vsel %vm368, %v451, 0
        %456 = vmatprep.subr.mxu0 0.0
        %457 = vmatpush1.xpose.msra.mxu0 %v454
        %458 = vmatprep.subr.mxu0 0.0
        %459 = vmatpush1.xpose.msra.mxu0 0.0
        %460 = vmatprep.subr.mxu0 0.0
        %461 = vmatpush1.xpose.msra.mxu0 0.0
        %462 = vmatprep.subr.mxu0 0.0
        %463 = vmatpush1.xpose.msra.mxu0 0.0
        %464 = vmatprep.subr.mxu0 0.0
        %465 = vmatpush1.xpose.msra.mxu0 0.0
        %466 = vmatprep.subr.mxu0 0.0
        %467 = vmatpush1.xpose.msra.mxu0 0.0
        %468 = vmatprep.subr.mxu0 0.0
        %469 = vmatpush1.xpose.msra.mxu0 0.0
        %470 = vmatprep.subr.mxu0 0.0
        %471 = vmatpush1.xpose.msra.mxu0 0.0
        %472 = vmatprep.subr.mxu0 0.0
        %473 = vmatpush1.xpose.msra.mxu0 0.0
        %474 = vmatprep.subr.mxu0 0.0
        %475 = vmatpush1.xpose.msra.mxu0 0.0
        %476 = vmatprep.subr.mxu0 0.0
        %477 = vmatpush1.xpose.msra.mxu0 0.0
        %478 = vmatprep.subr.mxu0 0.0
        %479 = vmatpush1.xpose.msra.mxu0 0.0
        %480 = vmatprep.subr.mxu0 0.0
        %481 = vmatpush1.xpose.msra.mxu0 0.0
        %482 = vmatprep.subr.mxu0 0.0
        %483 = vmatpush1.xpose.msra.mxu0 0.0
        %484 = vmatprep.subr.mxu0 0.0
        %485 = vmatpush1.xpose.msra.mxu0 0.0
        %486 = vmatprep.subr.mxu0 0.0
        %487 = vmatpush1.xpose.msra.mxu0 0.0
        %488 = vmatprep.subr.mxu0 0.0
        %489 = vmatpush1.xpose.msra.mxu0 0.0
        %490 = vmatprep.subr.mxu0 0.0
        %491 = vmatpush1.xpose.msra.mxu0 0.0
        %492 = vmatprep.subr.mxu0 0.0
        %493 = vmatpush1.xpose.msra.mxu0 0.0
        %494 = vmatprep.subr.mxu0 0.0
        %495 = vmatpush1.xpose.msra.mxu0 0.0
        %496 = vmatprep.subr.mxu0 0.0
        %497 = vmatpush1.xpose.msra.mxu0 0.0
        %498 = vmatprep.subr.mxu0 0.0
        %499 = vmatpush1.xpose.msra.mxu0 0.0
        %500 = vmatprep.subr.mxu0 0.0
        %501 = vmatpush1.xpose.msra.mxu0 0.0
        %502 = vmatprep.subr.mxu0 0.0
        %503 = vmatpush1.xpose.msra.mxu0 0.0
        %504 = vmatprep.subr.mxu0 0.0
        %505 = vmatpush1.xpose.msra.mxu0 0.0
        %506 = vmatprep.subr.mxu0 0.0
        %507 = vmatpush1.xpose.msra.mxu0 0.0
        %508 = vmatprep.subr.mxu0 0.0
        %509 = vmatpush1.xpose.msra.mxu0 0.0
        %510 = vmatprep.subr.mxu0 0.0
        %511 = vmatpush1.xpose.msra.mxu0 0.0
        %512 = vmatprep.subr.mxu0 0.0
        %513 = vmatpush1.xpose.msra.mxu0 0.0
        %514 = vmatprep.subr.mxu0 0.0
        %515 = vmatpush1.xpose.msra.mxu0 0.0
        %516 = vmatprep.subr.mxu0 0.0
        %517 = vmatpush1.xpose.msra.mxu0 0.0
        %518 = vmatprep.subr.mxu0 0.0
        %519 = vmatpush1.xpose.msra.mxu0 0.0
        %520 = vmatprep.mubr.f32.mxu0 0.0
        %521 = vmatmul.mubr.f32.gmra.mrb[0].mxu0 %v452
        %v522 = vpop.f32.mrb[0].mxu0
        %v523 = vadd.f32 0.0, %v522
        %v524 = vpop.f32.mrb[0].mxu0
        %525 = vdwg.mxu0
        %v526 = vmul.f32 %v523, 0.5
        %s527 = scalar_lea.vmem %s214, 8 [#allocation8]
        %528 = vst.msk [vmem:[%s527] sm:$0xff] %vm446, %v526
        %529 = vrot.lane.b32.xlu0 %v291, 120
        %v530 = vpop.permute.xlu0 %529
        %531 = vrot.lane.b32.xlu0 %v365, 120
        %v532 = vpop.permute.xlu0 %531
        %v533 = vsel %vm368, %v530, 0
        %v535 = vsel %vm368, %v532, 0
        %537 = vmatprep.subr.mxu0 0.0
        %538 = vmatpush1.xpose.msra.mxu0 %v535
        %539 = vmatprep.subr.mxu0 0.0
        %540 = vmatpush1.xpose.msra.mxu0 0.0
        %541 = vmatprep.subr.mxu0 0.0
        %542 = vmatpush1.xpose.msra.mxu0 0.0
        %543 = vmatprep.subr.mxu0 0.0
        %544 = vmatpush1.xpose.msra.mxu0 0.0
        %545 = vmatprep.subr.mxu0 0.0
        %546 = vmatpush1.xpose.msra.mxu0 0.0
        %547 = vmatprep.subr.mxu0 0.0
        %548 = vmatpush1.xpose.msra.mxu0 0.0
        %549 = vmatprep.subr.mxu0 0.0
        %550 = vmatpush1.xpose.msra.mxu0 0.0
        %551 = vmatprep.subr.mxu0 0.0
        %552 = vmatpush1.xpose.msra.mxu0 0.0
        %553 = vmatprep.subr.mxu0 0.0
        %554 = vmatpush1.xpose.msra.mxu0 0.0
        %555 = vmatprep.subr.mxu0 0.0
        %556 = vmatpush1.xpose.msra.mxu0 0.0
        %557 = vmatprep.subr.mxu0 0.0
        %558 = vmatpush1.xpose.msra.mxu0 0.0
        %559 = vmatprep.subr.mxu0 0.0
        %560 = vmatpush1.xpose.msra.mxu0 0.0
        %561 = vmatprep.subr.mxu0 0.0
        %562 = vmatpush1.xpose.msra.mxu0 0.0
        %563 = vmatprep.subr.mxu0 0.0
        %564 = vmatpush1.xpose.msra.mxu0 0.0
        %565 = vmatprep.subr.mxu0 0.0
        %566 = vmatpush1.xpose.msra.mxu0 0.0
        %567 = vmatprep.subr.mxu0 0.0
        %568 = vmatpush1.xpose.msra.mxu0 0.0
        %569 = vmatprep.subr.mxu0 0.0
        %570 = vmatpush1.xpose.msra.mxu0 0.0
        %571 = vmatprep.subr.mxu0 0.0
        %572 = vmatpush1.xpose.msra.mxu0 0.0
        %573 = vmatprep.subr.mxu0 0.0
        %574 = vmatpush1.xpose.msra.mxu0 0.0
        %575 = vmatprep.subr.mxu0 0.0
        %576 = vmatpush1.xpose.msra.mxu0 0.0
        %577 = vmatprep.subr.mxu0 0.0
        %578 = vmatpush1.xpose.msra.mxu0 0.0
        %579 = vmatprep.subr.mxu0 0.0
        %580 = vmatpush1.xpose.msra.mxu0 0.0
        %581 = vmatprep.subr.mxu0 0.0
        %582 = vmatpush1.xpose.msra.mxu0 0.0
        %583 = vmatprep.subr.mxu0 0.0
        %584 = vmatpush1.xpose.msra.mxu0 0.0
        %585 = vmatprep.subr.mxu0 0.0
        %586 = vmatpush1.xpose.msra.mxu0 0.0
        %587 = vmatprep.subr.mxu0 0.0
        %588 = vmatpush1.xpose.msra.mxu0 0.0
        %589 = vmatprep.subr.mxu0 0.0
        %590 = vmatpush1.xpose.msra.mxu0 0.0
        %591 = vmatprep.subr.mxu0 0.0
        %592 = vmatpush1.xpose.msra.mxu0 0.0
        %593 = vmatprep.subr.mxu0 0.0
        %594 = vmatpush1.xpose.msra.mxu0 0.0
        %595 = vmatprep.subr.mxu0 0.0
        %596 = vmatpush1.xpose.msra.mxu0 0.0
        %597 = vmatprep.subr.mxu0 0.0
        %598 = vmatpush1.xpose.msra.mxu0 0.0
        %599 = vmatprep.subr.mxu0 0.0
        %600 = vmatpush1.xpose.msra.mxu0 0.0
        %601 = vmatprep.mubr.f32.mxu0 0.0
        %602 = vmatmul.mubr.f32.gmra.mrb[0].mxu0 %v533
        %v603 = vpop.f32.mrb[0].mxu0
        %v604 = vadd.f32 0.0, %v603
        %v605 = vpop.f32.mrb[0].mxu0
        %606 = vdwg.mxu0
        %v607 = vmul.f32 %v604, 0.5
        %s608 = scalar_lea.vmem %s214, 16 [#allocation8]
        %609 = vst.msk [vmem:[%s608] sm:$0xff] %vm446, %v607
        %610 = vrot.lane.b32.xlu0 %v291, 116
        %v611 = vpop.permute.xlu0 %610
        %612 = vrot.lane.b32.xlu0 %v365, 116
        %v613 = vpop.permute.xlu0 %612
        %v614 = vsel %vm368, %v611, 0
        %v616 = vsel %vm368, %v613, 0
        %618 = vmatprep.subr.mxu0 0.0
        %619 = vmatpush1.xpose.msra.mxu0 %v616
        %620 = vmatprep.subr.mxu0 0.0
        %621 = vmatpush1.xpose.msra.mxu0 0.0
        %622 = vmatprep.subr.mxu0 0.0
        %623 = vmatpush1.xpose.msra.mxu0 0.0
        %624 = vmatprep.subr.mxu0 0.0
        %625 = vmatpush1.xpose.msra.mxu0 0.0
        %626 = vmatprep.subr.mxu0 0.0
        %627 = vmatpush1.xpose.msra.mxu0 0.0
        %628 = vmatprep.subr.mxu0 0.0
        %629 = vmatpush1.xpose.msra.mxu0 0.0
        %630 = vmatprep.subr.mxu0 0.0
        %631 = vmatpush1.xpose.msra.mxu0 0.0
        %632 = vmatprep.subr.mxu0 0.0
        %633 = vmatpush1.xpose.msra.mxu0 0.0
        %634 = vmatprep.subr.mxu0 0.0
        %635 = vmatpush1.xpose.msra.mxu0 0.0
        %636 = vmatprep.subr.mxu0 0.0
        %637 = vmatpush1.xpose.msra.mxu0 0.0
        %638 = vmatprep.subr.mxu0 0.0
        %639 = vmatpush1.xpose.msra.mxu0 0.0
        %640 = vmatprep.subr.mxu0 0.0
        %641 = vmatpush1.xpose.msra.mxu0 0.0
        %642 = vmatprep.subr.mxu0 0.0
        %643 = vmatpush1.xpose.msra.mxu0 0.0
        %644 = vmatprep.subr.mxu0 0.0
        %645 = vmatpush1.xpose.msra.mxu0 0.0
        %646 = vmatprep.subr.mxu0 0.0
        %647 = vmatpush1.xpose.msra.mxu0 0.0
        %648 = vmatprep.subr.mxu0 0.0
        %649 = vmatpush1.xpose.msra.mxu0 0.0
        %650 = vmatprep.subr.mxu0 0.0
        %651 = vmatpush1.xpose.msra.mxu0 0.0
        %652 = vmatprep.subr.mxu0 0.0
        %653 = vmatpush1.xpose.msra.mxu0 0.0
        %654 = vmatprep.subr.mxu0 0.0
        %655 = vmatpush1.xpose.msra.mxu0 0.0
        %656 = vmatprep.subr.mxu0 0.0
        %657 = vmatpush1.xpose.msra.mxu0 0.0
        %658 = vmatprep.subr.mxu0 0.0
        %659 = vmatpush1.xpose.msra.mxu0 0.0
        %660 = vmatprep.subr.mxu0 0.0
        %661 = vmatpush1.xpose.msra.mxu0 0.0
        %662 = vmatprep.subr.mxu0 0.0
        %663 = vmatpush1.xpose.msra.mxu0 0.0
        %664 = vmatprep.subr.mxu0 0.0
        %665 = vmatpush1.xpose.msra.mxu0 0.0
        %666 = vmatprep.subr.mxu0 0.0
        %667 = vmatpush1.xpose.msra.mxu0 0.0
        %668 = vmatprep.subr.mxu0 0.0
        %669 = vmatpush1.xpose.msra.mxu0 0.0
        %670 = vmatprep.subr.mxu0 0.0
        %671 = vmatpush1.xpose.msra.mxu0 0.0
        %672 = vmatprep.subr.mxu0 0.0
        %673 = vmatpush1.xpose.msra.mxu0 0.0
        %674 = vmatprep.subr.mxu0 0.0
        %675 = vmatpush1.xpose.msra.mxu0 0.0
        %676 = vmatprep.subr.mxu0 0.0
        %677 = vmatpush1.xpose.msra.mxu0 0.0
        %678 = vmatprep.subr.mxu0 0.0
        %679 = vmatpush1.xpose.msra.mxu0 0.0
        %680 = vmatprep.subr.mxu0 0.0
        %681 = vmatpush1.xpose.msra.mxu0 0.0
        %682 = vmatprep.mubr.f32.mxu0 0.0
        %683 = vmatmul.mubr.f32.gmra.mrb[0].mxu0 %v614
        %v684 = vpop.f32.mrb[0].mxu0
        %v685 = vadd.f32 0.0, %v684
        %v686 = vpop.f32.mrb[0].mxu0
        %687 = vdwg.mxu0
        %v688 = vmul.f32 %v685, 0.5
        %s689 = scalar_lea.vmem %s214, 24 [#allocation8]
        %690 = vst.msk [vmem:[%s689] sm:$0xff] %vm446, %v688
        %691 = vrot.lane.b32.xlu0 %v291, 112
        %v692 = vpop.permute.xlu0 %691
        %693 = vrot.lane.b32.xlu0 %v365, 112
        %v694 = vpop.permute.xlu0 %693
        %v695 = vsel %vm368, %v692, 0
        %v697 = vsel %vm368, %v694, 0
        %699 = vmatprep.subr.mxu0 0.0
        %700 = vmatpush1.xpose.msra.mxu0 %v697
        %701 = vmatprep.subr.mxu0 0.0
        %702 = vmatpush1.xpose.msra.mxu0 0.0
        %703 = vmatprep.subr.mxu0 0.0
        %704 = vmatpush1.xpose.msra.mxu0 0.0
        %705 = vmatprep.subr.mxu0 0.0
        %706 = vmatpush1.xpose.msra.mxu0 0.0
        %707 = vmatprep.subr.mxu0 0.0
        %708 = vmatpush1.xpose.msra.mxu0 0.0
        %709 = vmatprep.subr.mxu0 0.0
        %710 = vmatpush1.xpose.msra.mxu0 0.0
        %711 = vmatprep.subr.mxu0 0.0
        %712 = vmatpush1.xpose.msra.mxu0 0.0
        %713 = vmatprep.subr.mxu0 0.0
        %714 = vmatpush1.xpose.msra.mxu0 0.0
        %715 = vmatprep.subr.mxu0 0.0
        %716 = vmatpush1.xpose.msra.mxu0 0.0
        %717 = vmatprep.subr.mxu0 0.0
        %718 = vmatpush1.xpose.msra.mxu0 0.0
        %719 = vmatprep.subr.mxu0 0.0
        %720 = vmatpush1.xpose.msra.mxu0 0.0
        %721 = vmatprep.subr.mxu0 0.0
        %722 = vmatpush1.xpose.msra.mxu0 0.0
        %723 = vmatprep.subr.mxu0 0.0
        %724 = vmatpush1.xpose.msra.mxu0 0.0
        %725 = vmatprep.subr.mxu0 0.0
        %726 = vmatpush1.xpose.msra.mxu0 0.0
        %727 = vmatprep.subr.mxu0 0.0
        %728 = vmatpush1.xpose.msra.mxu0 0.0
        %729 = vmatprep.subr.mxu0 0.0
        %730 = vmatpush1.xpose.msra.mxu0 0.0
        %731 = vmatprep.subr.mxu0 0.0
        %732 = vmatpush1.xpose.msra.mxu0 0.0
        %733 = vmatprep.subr.mxu0 0.0
        %734 = vmatpush1.xpose.msra.mxu0 0.0
        %735 = vmatprep.subr.mxu0 0.0
        %736 = vmatpush1.xpose.msra.mxu0 0.0
        %737 = vmatprep.subr.mxu0 0.0
        %738 = vmatpush1.xpose.msra.mxu0 0.0
        %739 = vmatprep.subr.mxu0 0.0
        %740 = vmatpush1.xpose.msra.mxu0 0.0
        %741 = vmatprep.subr.mxu0 0.0
        %742 = vmatpush1.xpose.msra.mxu0 0.0
        %743 = vmatprep.subr.mxu0 0.0
        %744 = vmatpush1.xpose.msra.mxu0 0.0
        %745 = vmatprep.subr.mxu0 0.0
        %746 = vmatpush1.xpose.msra.mxu0 0.0
        %747 = vmatprep.subr.mxu0 0.0
        %748 = vmatpush1.xpose.msra.mxu0 0.0
        %749 = vmatprep.subr.mxu0 0.0
        %750 = vmatpush1.xpose.msra.mxu0 0.0
        %751 = vmatprep.subr.mxu0 0.0
        %752 = vmatpush1.xpose.msra.mxu0 0.0
        %753 = vmatprep.subr.mxu0 0.0
        %754 = vmatpush1.xpose.msra.mxu0 0.0
        %755 = vmatprep.subr.mxu0 0.0
        %756 = vmatpush1.xpose.msra.mxu0 0.0
        %757 = vmatprep.subr.mxu0 0.0
        %758 = vmatpush1.xpose.msra.mxu0 0.0
        %759 = vmatprep.subr.mxu0 0.0
        %760 = vmatpush1.xpose.msra.mxu0 0.0
        %761 = vmatprep.subr.mxu0 0.0
        %762 = vmatpush1.xpose.msra.mxu0 0.0
        %763 = vmatprep.mubr.f32.mxu0 0.0
        %764 = vmatmul.mubr.f32.gmra.mrb[0].mxu0 %v695
        %v765 = vpop.f32.mrb[0].mxu0
        %v766 = vadd.f32 0.0, %v765
        %v767 = vpop.f32.mrb[0].mxu0
        %768 = vdwg.mxu0
        %v769 = vmul.f32 %v766, 0.5
        %s770 = scalar_lea.vmem %s214, 32 [#allocation8]
        %771 = vst.msk [vmem:[%s770] sm:$0xff] %vm446, %v769
        %772 = vrot.lane.b32.xlu0 %v291, 108
        %v773 = vpop.permute.xlu0 %772
        %774 = vrot.lane.b32.xlu0 %v365, 108
        %v775 = vpop.permute.xlu0 %774
        %v776 = vsel %vm368, %v773, 0
        %v778 = vsel %vm368, %v775, 0
        %780 = vmatprep.subr.mxu0 0.0
        %781 = vmatpush1.xpose.msra.mxu0 %v778
        %782 = vmatprep.subr.mxu0 0.0
        %783 = vmatpush1.xpose.msra.mxu0 0.0
        %784 = vmatprep.subr.mxu0 0.0
        %785 = vmatpush1.xpose.msra.mxu0 0.0
        %786 = vmatprep.subr.mxu0 0.0
        %787 = vmatpush1.xpose.msra.mxu0 0.0
        %788 = vmatprep.subr.mxu0 0.0
        %789 = vmatpush1.xpose.msra.mxu0 0.0
        %790 = vmatprep.subr.mxu0 0.0
        %791 = vmatpush1.xpose.msra.mxu0 0.0
        %792 = vmatprep.subr.mxu0 0.0
        %793 = vmatpush1.xpose.msra.mxu0 0.0
        %794 = vmatprep.subr.mxu0 0.0
        %795 = vmatpush1.xpose.msra.mxu0 0.0
        %796 = vmatprep.subr.mxu0 0.0
        %797 = vmatpush1.xpose.msra.mxu0 0.0
        %798 = vmatprep.subr.mxu0 0.0
        %799 = vmatpush1.xpose.msra.mxu0 0.0
        %800 = vmatprep.subr.mxu0 0.0
        %801 = vmatpush1.xpose.msra.mxu0 0.0
        %802 = vmatprep.subr.mxu0 0.0
        %803 = vmatpush1.xpose.msra.mxu0 0.0
        %804 = vmatprep.subr.mxu0 0.0
        %805 = vmatpush1.xpose.msra.mxu0 0.0
        %806 = vmatprep.subr.mxu0 0.0
        %807 = vmatpush1.xpose.msra.mxu0 0.0
        %808 = vmatprep.subr.mxu0 0.0
        %809 = vmatpush1.xpose.msra.mxu0 0.0
        %810 = vmatprep.subr.mxu0 0.0
        %811 = vmatpush1.xpose.msra.mxu0 0.0
        %812 = vmatprep.subr.mxu0 0.0
        %813 = vmatpush1.xpose.msra.mxu0 0.0
        %814 = vmatprep.subr.mxu0 0.0
        %815 = vmatpush1.xpose.msra.mxu0 0.0
        %816 = vmatprep.subr.mxu0 0.0
        %817 = vmatpush1.xpose.msra.mxu0 0.0
        %818 = vmatprep.subr.mxu0 0.0
        %819 = vmatpush1.xpose.msra.mxu0 0.0
        %820 = vmatprep.subr.mxu0 0.0
        %821 = vmatpush1.xpose.msra.mxu0 0.0
        %822 = vmatprep.subr.mxu0 0.0
        %823 = vmatpush1.xpose.msra.mxu0 0.0
        %824 = vmatprep.subr.mxu0 0.0
        %825 = vmatpush1.xpose.msra.mxu0 0.0
        %826 = vmatprep.subr.mxu0 0.0
        %827 = vmatpush1.xpose.msra.mxu0 0.0
        %828 = vmatprep.subr.mxu0 0.0
        %829 = vmatpush1.xpose.msra.mxu0 0.0
        %830 = vmatprep.subr.mxu0 0.0
        %831 = vmatpush1.xpose.msra.mxu0 0.0
        %832 = vmatprep.subr.mxu0 0.0
        %833 = vmatpush1.xpose.msra.mxu0 0.0
        %834 = vmatprep.subr.mxu0 0.0
        %835 = vmatpush1.xpose.msra.mxu0 0.0
        %836 = vmatprep.subr.mxu0 0.0
        %837 = vmatpush1.xpose.msra.mxu0 0.0
        %838 = vmatprep.subr.mxu0 0.0
        %839 = vmatpush1.xpose.msra.mxu0 0.0
        %840 = vmatprep.subr.mxu0 0.0
        %841 = vmatpush1.xpose.msra.mxu0 0.0
        %842 = vmatprep.subr.mxu0 0.0
        %843 = vmatpush1.xpose.msra.mxu0 0.0
        %844 = vmatprep.mubr.f32.mxu0 0.0
        %845 = vmatmul.mubr.f32.gmra.mrb[0].mxu0 %v776
        %v846 = vpop.f32.mrb[0].mxu0
        %v847 = vadd.f32 0.0, %v846
        %v848 = vpop.f32.mrb[0].mxu0
        %849 = vdwg.mxu0
        %v850 = vmul.f32 %v847, 0.5
        %s851 = scalar_lea.vmem %s214, 40 [#allocation8]
        %852 = vst.msk [vmem:[%s851] sm:$0xff] %vm446, %v850
        %853 = vrot.lane.b32.xlu0 %v291, 104
        %v854 = vpop.permute.xlu0 %853
        %855 = vrot.lane.b32.xlu0 %v365, 104
        %v856 = vpop.permute.xlu0 %855
        %v857 = vsel %vm368, %v854, 0
        %v859 = vsel %vm368, %v856, 0
        %861 = vmatprep.subr.mxu0 0.0
        %862 = vmatpush1.xpose.msra.mxu0 %v859
        %863 = vmatprep.subr.mxu0 0.0
        %864 = vmatpush1.xpose.msra.mxu0 0.0
        %865 = vmatprep.subr.mxu0 0.0
        %866 = vmatpush1.xpose.msra.mxu0 0.0
        %867 = vmatprep.subr.mxu0 0.0
        %868 = vmatpush1.xpose.msra.mxu0 0.0
        %869 = vmatprep.subr.mxu0 0.0
        %870 = vmatpush1.xpose.msra.mxu0 0.0
        %871 = vmatprep.subr.mxu0 0.0
        %872 = vmatpush1.xpose.msra.mxu0 0.0
        %873 = vmatprep.subr.mxu0 0.0
        %874 = vmatpush1.xpose.msra.mxu0 0.0
        %875 = vmatprep.subr.mxu0 0.0
        %876 = vmatpush1.xpose.msra.mxu0 0.0
        %877 = vmatprep.subr.mxu0 0.0
        %878 = vmatpush1.xpose.msra.mxu0 0.0
        %879 = vmatprep.subr.mxu0 0.0
        %880 = vmatpush1.xpose.msra.mxu0 0.0
        %881 = vmatprep.subr.mxu0 0.0
        %882 = vmatpush1.xpose.msra.mxu0 0.0
        %883 = vmatprep.subr.mxu0 0.0
        %884 = vmatpush1.xpose.msra.mxu0 0.0
        %885 = vmatprep.subr.mxu0 0.0
        %886 = vmatpush1.xpose.msra.mxu0 0.0
        %887 = vmatprep.subr.mxu0 0.0
        %888 = vmatpush1.xpose.msra.mxu0 0.0
        %889 = vmatprep.subr.mxu0 0.0
        %890 = vmatpush1.xpose.msra.mxu0 0.0
        %891 = vmatprep.subr.mxu0 0.0
        %892 = vmatpush1.xpose.msra.mxu0 0.0
        %893 = vmatprep.subr.mxu0 0.0
        %894 = vmatpush1.xpose.msra.mxu0 0.0
        %895 = vmatprep.subr.mxu0 0.0
        %896 = vmatpush1.xpose.msra.mxu0 0.0
        %897 = vmatprep.subr.mxu0 0.0
        %898 = vmatpush1.xpose.msra.mxu0 0.0
        %899 = vmatprep.subr.mxu0 0.0
        %900 = vmatpush1.xpose.msra.mxu0 0.0
        %901 = vmatprep.subr.mxu0 0.0
        %902 = vmatpush1.xpose.msra.mxu0 0.0
        %903 = vmatprep.subr.mxu0 0.0
        %904 = vmatpush1.xpose.msra.mxu0 0.0
        %905 = vmatprep.subr.mxu0 0.0
        %906 = vmatpush1.xpose.msra.mxu0 0.0
        %907 = vmatprep.subr.mxu0 0.0
        %908 = vmatpush1.xpose.msra.mxu0 0.0
        %909 = vmatprep.subr.mxu0 0.0
        %910 = vmatpush1.xpose.msra.mxu0 0.0
        %911 = vmatprep.subr.mxu0 0.0
        %912 = vmatpush1.xpose.msra.mxu0 0.0
        %913 = vmatprep.subr.mxu0 0.0
        %914 = vmatpush1.xpose.msra.mxu0 0.0
        %915 = vmatprep.subr.mxu0 0.0
        %916 = vmatpush1.xpose.msra.mxu0 0.0
        %917 = vmatprep.subr.mxu0 0.0
        %918 = vmatpush1.xpose.msra.mxu0 0.0
        %919 = vmatprep.subr.mxu0 0.0
        %920 = vmatpush1.xpose.msra.mxu0 0.0
        %921 = vmatprep.subr.mxu0 0.0
        %922 = vmatpush1.xpose.msra.mxu0 0.0
        %923 = vmatprep.subr.mxu0 0.0
        %924 = vmatpush1.xpose.msra.mxu0 0.0
        %925 = vmatprep.mubr.f32.mxu0 0.0
        %926 = vmatmul.mubr.f32.gmra.mrb[0].mxu0 %v857
        %v927 = vpop.f32.mrb[0].mxu0
        %v928 = vadd.f32 0.0, %v927
        %v929 = vpop.f32.mrb[0].mxu0
        %930 = vdwg.mxu0
        %v931 = vmul.f32 %v928, 0.5
        %s932 = scalar_lea.vmem %s214, 48 [#allocation8]
        %933 = vst.msk [vmem:[%s932] sm:$0xff] %vm446, %v931
        %934 = vrot.lane.b32.xlu0 %v291, 100
        %v935 = vpop.permute.xlu0 %934
        %936 = vrot.lane.b32.xlu0 %v365, 100
        %v937 = vpop.permute.xlu0 %936
        %v938 = vsel %vm368, %v935, 0
        %v940 = vsel %vm368, %v937, 0
        %942 = vmatprep.subr.mxu0 0.0
        %943 = vmatpush1.xpose.msra.mxu0 %v940
        %944 = vmatprep.subr.mxu0 0.0
        %945 = vmatpush1.xpose.msra.mxu0 0.0
        %946 = vmatprep.subr.mxu0 0.0
        %947 = vmatpush1.xpose.msra.mxu0 0.0
        %948 = vmatprep.subr.mxu0 0.0
        %949 = vmatpush1.xpose.msra.mxu0 0.0
        %950 = vmatprep.subr.mxu0 0.0
        %951 = vmatpush1.xpose.msra.mxu0 0.0
        %952 = vmatprep.subr.mxu0 0.0
        %953 = vmatpush1.xpose.msra.mxu0 0.0
        %954 = vmatprep.subr.mxu0 0.0
        %955 = vmatpush1.xpose.msra.mxu0 0.0
        %956 = vmatprep.subr.mxu0 0.0
        %957 = vmatpush1.xpose.msra.mxu0 0.0
        %958 = vmatprep.subr.mxu0 0.0
        %959 = vmatpush1.xpose.msra.mxu0 0.0
        %960 = vmatprep.subr.mxu0 0.0
        %961 = vmatpush1.xpose.msra.mxu0 0.0
        %962 = vmatprep.subr.mxu0 0.0
        %963 = vmatpush1.xpose.msra.mxu0 0.0
        %964 = vmatprep.subr.mxu0 0.0
        %965 = vmatpush1.xpose.msra.mxu0 0.0
        %966 = vmatprep.subr.mxu0 0.0
        %967 = vmatpush1.xpose.msra.mxu0 0.0
        %968 = vmatprep.subr.mxu0 0.0
        %969 = vmatpush1.xpose.msra.mxu0 0.0
        %970 = vmatprep.subr.mxu0 0.0
        %971 = vmatpush1.xpose.msra.mxu0 0.0
        %972 = vmatprep.subr.mxu0 0.0
        %973 = vmatpush1.xpose.msra.mxu0 0.0
        %974 = vmatprep.subr.mxu0 0.0
        %975 = vmatpush1.xpose.msra.mxu0 0.0
        %976 = vmatprep.subr.mxu0 0.0
        %977 = vmatpush1.xpose.msra.mxu0 0.0
        %978 = vmatprep.subr.mxu0 0.0
        %979 = vmatpush1.xpose.msra.mxu0 0.0
        %980 = vmatprep.subr.mxu0 0.0
        %981 = vmatpush1.xpose.msra.mxu0 0.0
        %982 = vmatprep.subr.mxu0 0.0
        %983 = vmatpush1.xpose.msra.mxu0 0.0
        %984 = vmatprep.subr.mxu0 0.0
        %985 = vmatpush1.xpose.msra.mxu0 0.0
        %986 = vmatprep.subr.mxu0 0.0
        %987 = vmatpush1.xpose.msra.mxu0 0.0
        %988 = vmatprep.subr.mxu0 0.0
        %989 = vmatpush1.xpose.msra.mxu0 0.0
        %990 = vmatprep.subr.mxu0 0.0
        %991 = vmatpush1.xpose.msra.mxu0 0.0
        %992 = vmatprep.subr.mxu0 0.0
        %993 = vmatpush1.xpose.msra.mxu0 0.0
        %994 = vmatprep.subr.mxu0 0.0
        %995 = vmatpush1.xpose.msra.mxu0 0.0
        %996 = vmatprep.subr.mxu0 0.0
        %997 = vmatpush1.xpose.msra.mxu0 0.0
        %998 = vmatprep.subr.mxu0 0.0
        %999 = vmatpush1.xpose.msra.mxu0 0.0
        %1000 = vmatprep.subr.mxu0 0.0
        %1001 = vmatpush1.xpose.msra.mxu0 0.0
        %1002 = vmatprep.subr.mxu0 0.0
        %1003 = vmatpush1.xpose.msra.mxu0 0.0
        %1004 = vmatprep.subr.mxu0 0.0
        %1005 = vmatpush1.xpose.msra.mxu0 0.0
        %1006 = vmatprep.mubr.f32.mxu0 0.0
        %1007 = vmatmul.mubr.f32.gmra.mrb[0].mxu0 %v938
        %v1008 = vpop.f32.mrb[0].mxu0
        %v1009 = vadd.f32 0.0, %v1008
        %v1010 = vpop.f32.mrb[0].mxu0
        %1011 = vdwg.mxu0
        %v1012 = vmul.f32 %v1009, 0.5
        %s1013 = scalar_lea.vmem %s214, 56 [#allocation8]
        %1014 = vst.msk [vmem:[%s1013] sm:$0xff] %vm446, %v1012
        %s1015 = sand.u32 %s97, 1
        %s1016 = scalar_lea.sflag [#allocation4], %s1015
        %s1017 = sand.u32 %s97, 1
        %s1018 = smul.addr %s1017, 64
        %s1019 = scalar_lea.vmem [#allocation8], %s1018
        // Predicated region
        $region45: #{tpu_custom_call.1} parent=31 // pred_check
          %p1020 = pneg %p107
        $region46: #{tpu_custom_call.1} parent=31 // pred_check_branch
          %1022 = sbr.rel (%p1020) target = $region48
        $region47: #{tpu_custom_call.1} parent=31 // pred_region
          %s1024 = ssub.s32 1024, 1024
          %1025 = vsyncadd %s1016, %s1024
          %s1026 = smul.addr %s21, 128
          %s1027 = scalar_lea.hbm %s3, %s1026
          %s1028 = sshll.u32 %s1019, 4
          %s1029 = int_to_ptr.vmem [resolvable:$true] %s1028
          %1034 = dma.vmem_to_hbm [thread:$0]  %s1029, 1024, %s1027, %s1016, 128, 256, 8
        $region48: #{tpu_custom_call.1} parent=31 // pred_fallthru
          _
      $region32: #{tpu_custom_call.1} parent=5 // pred_fallthru
        _
      %p1035 = scmp.le.s32.totalorder 2, %s16
      // Predicated region
      $region49: #{tpu_custom_call.1} parent=5 // pred_check
        %p1036 = pneg %p1035
      $region50: #{tpu_custom_call.1} parent=5 // pred_check_branch
        %1038 = sbr.rel (%p1036) target = $region52
      $region51: #{tpu_custom_call.1} parent=5 // pred_region
        %s1039 = ssub.s32 %s16, 2
        // Predicated region
        $region53: #{tpu_custom_call.1} parent=51 // pred_check
          %p1040 = pneg %p113
        $region54: #{tpu_custom_call.1} parent=51 // pred_check_branch
          %1042 = sbr.rel (%p1040) target = $region56
        $region55: #{tpu_custom_call.1} parent=51 // pred_region
          %s1043 = sand.u32 %s98, 1
          %s1044 = scalar_lea.sflag [#allocation4], %s1043
          %s1045 = sand.u32 %s98, 1
          %s1046 = smul.addr %s1045, 64
          %s1047 = scalar_lea.vmem [#allocation8], %s1046
          %1048 = dma.done %s1044, 1024
        $region56: #{tpu_custom_call.1} parent=51 // pred_fallthru
          _
      $region52: #{tpu_custom_call.1} parent=5 // pred_fallthru
        _
    $region6: #{tpu_custom_call.1} parent=1 // loop_footer
      %s20 = sadd.s32 1, %s16
    $region7: #{tpu_custom_call.1} parent=1 // loop_footer_branch
      %15 = sbr.rel target = $region3
    $region8: #{tpu_custom_call.1} parent=1 // loop_exit
      _
    %1049 = vsyncpa [#allocation3], 1
    %s1050 = scalar_lea.sflag [#allocation3], 1
    %1051 = vsyncpa %s1050, 1
    %1052 = vsyncpa [#allocation6], 1
    %1053 = vsyncpa [#allocation4], 1
    %s1054 = scalar_lea.sflag [#allocation4], 1
    %1055 = vsyncpa %s1054, 1

</llo_original>
